<compile_context>
chip_gen: v7x
topology: tpu7x:2x2x1
jax: 0.10.0
libtpu: 0.0.40
codegen_flags: <defaults>
</compile_context>

<pallas_src>
import functools

import jax
import jax.numpy as jnp
from jax.experimental import pallas as pl
from jax.experimental.pallas import tpu as pltpu


# Set to jnp.bfloat16 on v6e/v7x for higher MXU throughput (accumulation stays
# fp32 via preferred_element_type); fp32 default keeps bit-faithful numerics.
COMPUTE_DTYPE = jnp.float32


def _textcnn_kernel(x_ref, w_ref, b_ref, m_ref, o_ref, *, k_max, T,
                    compute_dtype):
    """Fused im2col conv (all kernel sizes) + bias + ReLU + masked max-pool.

    x_ref: (TB, Lp2, D)     padded token embeddings (Lp2 = Lp + k_max - k_min)
    w_ref: (k_max*D, C)     stacked, zero-padded conv weights (MXU RHS layout)
    b_ref: (1, C)           stacked conv biases
    m_ref: (T, C)           additive time-validity mask (0 valid, -1e30 invalid)
    o_ref: (TB, C)          pooled features
    """
    x = x_ref[...]                                    # (TB, Lp2, D)
    TB, _, D = x.shape
    KD, C = w_ref.shape

    # im2col: window t holds rows t .. t+k_max-1 concatenated along lanes.
    win = jnp.concatenate([x[:, i:i + T, :] for i in range(k_max)], axis=-1)
    win2 = win.reshape(TB * T, KD)                    # (TB*T, k_max*D)

    # Single MXU matmul, fp32 accumulation.
    s = jnp.dot(win2.astype(compute_dtype),
                w_ref[...].astype(compute_dtype),
                preferred_element_type=jnp.float32)   # (TB*T, C)

    s = s.reshape(TB, T, C) + b_ref[...]              # + bias
    s = jnp.maximum(s, 0.0)                           # ReLU
    s = s + m_ref[...]                                # mask invalid time steps
    o_ref[...] = jnp.max(s, axis=1)                   # max-pool over time


def _pick_batch_block(B, Lp2, D, T, KD, C):
    """Batch block size so input double-buffer + in-kernel temporaries fit VMEM."""
    bytes_per_example = 4 * (2 * Lp2 * D      # double-buffered x block
                             + T * KD         # im2col window tensor
                             + 2 * T * C      # matmul result / activation
                             + 2 * C)         # double-buffered output block
    budget = 24 << 20                         # conservative vs v7x's 64 MiB VMEM
    tb = max(1, budget // max(bytes_per_example, 1))
    if tb >= B:
        return B                              # single block: full-dim BlockSpec
    tb = (min(tb, 512) // 8) * 8              # tiled block: keep sublane-aligned
    return max(tb, 8)


@functools.partial(jax.jit, static_argnames=("k_max", "compute_dtype"))
def textcnn_forward(x, w, b, mask, *, k_max, compute_dtype=COMPUTE_DTYPE):
    """x: (B, Lp2, D); w: (k_max*D, C); b: (1, C); mask: (T, C) -> (B, C)."""
    B, Lp2, D = x.shape
    KD, C = w.shape
    T = mask.shape[0]

    TB = _pick_batch_block(B, Lp2, D, T, KD, C)
    Bp = ((B + TB - 1) // TB) * TB
    if Bp != B:
        x = jnp.concatenate(
            [x, jnp.zeros((Bp - B, Lp2, D), x.dtype)], axis=0)

    kern = functools.partial(_textcnn_kernel, k_max=k_max, T=T,
                             compute_dtype=compute_dtype)
    out = pl.pallas_call(
        kern,
        out_shape=jax.ShapeDtypeStruct((Bp, C), jnp.float32),
        grid_spec=pltpu.PrefetchScalarGridSpec(
            num_scalar_prefetch=0,
            grid=(Bp // TB,),
            in_specs=[
                pl.BlockSpec((TB, Lp2, D), lambda i: (i, 0, 0)),  # x (tiled)
                pl.BlockSpec((KD, C), lambda i: (0, 0)),          # weights
                pl.BlockSpec((1, C), lambda i: (0, 0)),           # bias
                pl.BlockSpec((T, C), lambda i: (0, 0)),           # time mask
            ],
            out_specs=pl.BlockSpec((TB, C), lambda i: (i, 0)),
        ),
        compiler_params=pltpu.CompilerParams(
            dimension_semantics=("parallel",)),
    )(x, w, b, mask)
    return out[:B]


class CNNPallas:
    """JAX/Pallas port of the PyTorch CNN module (inference semantics)."""

    def __init__(self, config, key):
        self.kernel_sizes = [int(s) for s in config["kernel_sizes"].split(",")]
        self.k_max = max(self.kernel_sizes)
        self.k_min = min(self.kernel_sizes)
        self.kernel_num = config["mem_size"]
        assert self.kernel_num % len(self.kernel_sizes) == 0
        self.c_per = self.kernel_num // len(self.kernel_sizes)
        self.D = config["word_vec_size"]
        D, c_per = self.D, self.c_per

        # Per-size conv params (nn.Conv2d default init: uniform +/- 1/sqrt(fan_in)),
        # pre-baked at init into one stacked, zero-padded MXU RHS (k_max*D, C_total)
        # and a (1, C_total) bias row — the kernel never slices (C, k, D) weights.
        w_cols, b_cols = [], []
        for i, k in enumerate(self.kernel_sizes):
            wkey, bkey = jax.random.split(jax.random.fold_in(key, i))
            fan_in = 1 * k * D
            bound = 1.0 / (fan_in ** 0.5)
            w = jax.random.uniform(wkey, (c_per, k, D), jnp.float32, -bound, bound)
            bvec = jax.random.uniform(bkey, (c_per,), jnp.float32, -bound, bound)
            w_rhs = w.reshape(c_per, k * D).T                       # (k*D, c_per)
            w_rhs = jnp.pad(w_rhs, ((0, (self.k_max - k) * D), (0, 0)))
            w_cols.append(w_rhs)
            b_cols.append(bvec)
        self.w_stacked = jnp.concatenate(w_cols, axis=1)            # (k_max*D, C)
        self.b_stacked = jnp.concatenate(b_cols)[None, :]           # (1, C)

        self.dropout_p = config["dropout"]

    def __call__(self, tokens_emb, length=None):
        B, L, D = tokens_emb.shape
        # PyTorch pads to max_filter_size with a fresh buffer; we use zeros.
        Lp = max(L, self.k_max)
        # Extra rows so every filter size has its full T_k = Lp-k+1 windows
        # available in the common (size-k_max) window tensor.
        Lp2 = Lp + (self.k_max - self.k_min)
        T = Lp - self.k_min + 1
        x = tokens_emb
        if Lp2 > L:
            x = jnp.concatenate(
                [x, jnp.zeros((B, Lp2 - L, D), x.dtype)], axis=1)

        # Additive mask: filter of size k only produces outputs for t <= Lp-k;
        # partial windows into the zero padding get -1e30 so the time-max
        # matches the per-k PyTorch convolutions exactly.
        t_idx = jnp.arange(T)
        mask_cols = []
        for k in self.kernel_sizes:
            col = jnp.where(t_idx < (Lp - k + 1), 0.0, -1e30).astype(jnp.float32)
            mask_cols.append(jnp.tile(col[:, None], (1, self.c_per)))
        mask = jnp.concatenate(mask_cols, axis=1)                   # (T, C)

        rep = textcnn_forward(x, self.w_stacked, self.b_stacked, mask,
                              k_max=self.k_max)

        # Dropout is identity in eval mode.
        # TODO(synk): training-mode dropout (Bernoulli mask + 1/(1-p) scaling) not applied.
        return rep, None


if __name__ == "__main__":
    config = {
        "kernel_sizes": "3,4,5",
        "mem_size": 48,          # divisible by 3 kernel sizes -> 16 channels each
        "word_vec_size": 32,
        "dropout": 0.5,
    }

    key = jax.random.PRNGKey(0)
    pkey, xkey = jax.random.split(key)

    model = CNNPallas(config, pkey)

    B, L, D = 2, 8, 32
    tokens_emb = jax.random.normal(xkey, (B, L, D), jnp.float32)
    length = jnp.full((B,), L, jnp.int32)       # unused by forward, kept for parity

    rep, aux = model(tokens_emb, length)
    rep = jax.block_until_ready(rep)

    assert rep.shape == (B, config["mem_size"]), rep.shape
    assert aux is None

    # Pure-JAX reference: per-k conv -> ReLU -> max-pool -> concat.
    def ref_forward(x):
        Lp = max(L, model.k_max)
        xp = (jnp.concatenate([x, jnp.zeros((B, Lp - L, D), x.dtype)], axis=1)
              if Lp > L else x)
        outs = []
        for g, k in enumerate(model.kernel_sizes):
            c0, c1 = g * model.c_per, (g + 1) * model.c_per
            w = model.w_stacked[:k * D, c0:c1]                      # (k*D, c_per)
            bvec = model.b_stacked[0, c0:c1]
            Tk = Lp - k + 1
            win = jnp.stack(
                [xp[:, t:t + k, :].reshape(B, k * D) for t in range(Tk)], axis=1)
            s = jnp.maximum(win @ w + bvec, 0.0)
            outs.append(jnp.max(s, axis=1))
        return jnp.concatenate(outs, axis=1)

    ref = ref_forward(tokens_emb)
    assert jnp.allclose(rep, ref, atol=1e-4, rtol=1e-4), \
        float(jnp.max(jnp.abs(rep - ref)))

    print("KERNEL_OK")
</pallas_src>

<mosaic_0001>
module attributes {stable_mosaic.version = 11 : i64} {
  func.func @_textcnn_kernel(%arg0: i32, %arg1: memref<2x10x32xf32, #tpu.memory_space<vmem>>, %arg2: memref<160x48xf32, #tpu.memory_space<vmem>>, %arg3: memref<1x48xf32, #tpu.memory_space<vmem>>, %arg4: memref<6x48xf32, #tpu.memory_space<vmem>>, %arg5: memref<2x48xf32, #tpu.memory_space<vmem>>) attributes {dimension_semantics = [#tpu.dimension_semantics<parallel>], iteration_bounds = array<i64: 1>, scalar_prefetch = 0 : i64, scratch_operands = 0 : i64, tpu.core_type = #tpu.core_type<tc>, window_params = [{transform_indices = @transform_0, window_bounds = array<i64: 2, 10, 32>}, {pipeline_mode = #tpu.pipeline_mode<synchronous>, transform_indices = @transform_1, window_bounds = array<i64: 160, 48>}, {pipeline_mode = #tpu.pipeline_mode<synchronous>, transform_indices = @transform_2, window_bounds = array<i64: 1, 48>}, {pipeline_mode = #tpu.pipeline_mode<synchronous>, transform_indices = @transform_3, window_bounds = array<i64: 6, 48>}, {transform_indices = @transform_4, window_bounds = array<i64: 2, 48>}]} {
    %c0 = arith.constant 0 : index
    %c0_0 = arith.constant 0 : index
    %c0_1 = arith.constant 0 : index
    %0 = vector.load %arg1[%c0, %c0_0, %c0_1] : memref<2x10x32xf32, #tpu.memory_space<vmem>>, vector<2x10x32xf32>
    %1 = vector.extract_strided_slice %0 {offsets = [0, 0, 0], sizes = [2, 6, 32], strides = [1, 1, 1]} : vector<2x10x32xf32> to vector<2x6x32xf32>
    %2 = vector.extract_strided_slice %0 {offsets = [0, 1, 0], sizes = [2, 6, 32], strides = [1, 1, 1]} : vector<2x10x32xf32> to vector<2x6x32xf32>
    %3 = vector.extract_strided_slice %0 {offsets = [0, 2, 0], sizes = [2, 6, 32], strides = [1, 1, 1]} : vector<2x10x32xf32> to vector<2x6x32xf32>
    %4 = vector.extract_strided_slice %0 {offsets = [0, 3, 0], sizes = [2, 6, 32], strides = [1, 1, 1]} : vector<2x10x32xf32> to vector<2x6x32xf32>
    %5 = vector.extract_strided_slice %0 {offsets = [0, 4, 0], sizes = [2, 6, 32], strides = [1, 1, 1]} : vector<2x10x32xf32> to vector<2x6x32xf32>
    %6 = tpu.concatenate %1, %2, %3, %4, %5 in 2 : vector<2x6x32xf32>, vector<2x6x32xf32>, vector<2x6x32xf32>, vector<2x6x32xf32>, vector<2x6x32xf32> -> vector<2x6x160xf32>
    %7 = vector.shape_cast %6 : vector<2x6x160xf32> to vector<12x160xf32>
    %c0_2 = arith.constant 0 : index
    %c0_3 = arith.constant 0 : index
    %8 = vector.load %arg2[%c0_2, %c0_3] : memref<160x48xf32, #tpu.memory_space<vmem>>, vector<160x48xf32>
    %cst = arith.constant dense<0.000000e+00> : vector<12x48xf32>
    %9 = tpu.matmul %7, %8, %cst {dimension_numbers = #tpu.dot_dimension_numbers<[1], [0], [0], [1], [0, 0, 1, 1], [], []>} : vector<12x160xf32>, vector<160x48xf32>, vector<12x48xf32> -> vector<12x48xf32>
    %10 = vector.shape_cast %9 : vector<12x48xf32> to vector<2x6x48xf32>
    %c0_4 = arith.constant 0 : index
    %c0_5 = arith.constant 0 : index
    %11 = vector.load %arg3[%c0_4, %c0_5] : memref<1x48xf32, #tpu.memory_space<vmem>>, vector<1x48xf32>
    %12 = vector.shape_cast %11 : vector<1x48xf32> to vector<1x1x48xf32>
    %13 = vector.broadcast %12 : vector<1x1x48xf32> to vector<2x6x48xf32>
    %14 = arith.addf %10, %13 : vector<2x6x48xf32>
    %cst_6 = arith.constant 0.000000e+00 : f32
    %15 = vector.broadcast %cst_6 : f32 to vector<2x6x48xf32>
    %16 = arith.maximumf %14, %15 : vector<2x6x48xf32>
    %c0_7 = arith.constant 0 : index
    %c0_8 = arith.constant 0 : index
    %17 = vector.load %arg4[%c0_7, %c0_8] : memref<6x48xf32, #tpu.memory_space<vmem>>, vector<6x48xf32>
    %18 = vector.shape_cast %17 : vector<6x48xf32> to vector<1x6x48xf32>
    %19 = vector.broadcast %18 : vector<1x6x48xf32> to vector<2x6x48xf32>
    %20 = arith.addf %16, %19 : vector<2x6x48xf32>
    %cst_9 = arith.constant dense<0xFF800000> : vector<2x48xf32>
    %21 = vector.multi_reduction <maximumf>, %20, %cst_9 [1] : vector<2x6x48xf32> to vector<2x48xf32>
    %c0_10 = arith.constant 0 : index
    %c0_11 = arith.constant 0 : index
    %22 = vector.load %arg5[%c0_10, %c0_11] : memref<2x48xf32, #tpu.memory_space<vmem>>, vector<2x48xf32>
    tpu.vector_store %arg5[%c0_10, %c0_11], %21 {strides = array<i32>} : memref<2x48xf32, #tpu.memory_space<vmem>>, vector<2x48xf32>,
    return
  }
  func.func @transform_0(%arg0: i32) -> (i32, i32, i32) {
    %c0_i32 = arith.constant 0 : i32
    %c0_i32_0 = arith.constant 0 : i32
    %c0_i32_1 = arith.constant 0 : i32
    return %arg0, %c0_i32, %c0_i32_0 : i32, i32, i32
  }
  func.func @transform_1(%arg0: i32) -> (i32, i32) {
    %c0_i32 = arith.constant 0 : i32
    %c0_i32_0 = arith.constant 0 : i32
    %c0_i32_1 = arith.constant 0 : i32
    return %c0_i32, %c0_i32_0 : i32, i32
  }
  func.func @transform_2(%arg0: i32) -> (i32, i32) {
    %c0_i32 = arith.constant 0 : i32
    %c0_i32_0 = arith.constant 0 : i32
    %c0_i32_1 = arith.constant 0 : i32
    return %c0_i32, %c0_i32_0 : i32, i32
  }
  func.func @transform_3(%arg0: i32) -> (i32, i32) {
    %c0_i32 = arith.constant 0 : i32
    %c0_i32_0 = arith.constant 0 : i32
    %c0_i32_1 = arith.constant 0 : i32
    return %c0_i32, %c0_i32_0 : i32, i32
  }
  func.func @transform_4(%arg0: i32) -> (i32, i32) {
    %c0_i32 = arith.constant 0 : i32
    %c0_i32_0 = arith.constant 0 : i32
    return %arg0, %c0_i32 : i32, i32
  }
}

</mosaic_0001>

<llo_original>
// kernel: textcnn_forward.1
$region0: #{textcnn_forward.1}
  #allocation0 [shape = 'u32[]', space=smem, size = 0x4, offset = 0x4, fixed_abs, tag = 'smem constant byte address 0x4 - core index']
  #allocation1 [shape = 'u32[144,128]{1,0:T(1,128)}', space=vmem, size = 0x12000, scoped, tag = 'internal scratch']
  %s0 = inlined_call_operand.vmem [shape: f32[2,10,32], index: 0, kind: input, shape index: {}]
  %s1 = inlined_call_operand.vmem [shape: f32[160,48], index: 1, kind: input, shape index: {}]
  %s2 = inlined_call_operand.vmem [shape: f32[1,48], index: 2, kind: input, shape index: {}]
  %s3 = inlined_call_operand.vmem [shape: f32[6,48], index: 3, kind: input, shape index: {}]
  %s4 = inlined_call_operand.hbm [shape: f32[2,48], index: 4, kind: output, shape index: {}]
  %s5 = sld [smem:[#allocation0]]
  $region26: #{textcnn_forward.1} parent=0
    _
  %s7 = ssub.s32 1, %s5
  %s8 = scalar_select 0, %s7, %s5
  $region1: #{textcnn_forward.1} parent=0
    #allocation2 [shape = 'u8[1024]{0}', space=vmem, size = 0x400, scoped, tag = 'output window, operand 0, single buffered']
    #allocation3 [shape = 's32[1]{0}', space=sflag, size = 0x4, scoped, tag = 'scoped memory for textcnn_forward.1']
    %9 = vsyncpa [#allocation3], 0
    // Predicated region
    $region2: #{textcnn_forward.1} parent=1 // pred_check
      _
    $region3: #{textcnn_forward.1} parent=1 // pred_check_branch
      %11 = sbr.rel (0) target = $region5
    $region4: #{textcnn_forward.1} parent=1 // pred_region
      _
    $region5: #{textcnn_forward.1} parent=1 // pred_fallthru
      _
    // Predicated region
    $region6: #{textcnn_forward.1} parent=1 // pred_check
      _
    $region7: #{textcnn_forward.1} parent=1 // pred_check_branch
      %13 = sbr.rel (0) target = $region9
    $region8: #{textcnn_forward.1} parent=1 // pred_region
      _
    $region9: #{textcnn_forward.1} parent=1 // pred_fallthru
      _
    // Predicated region
    $region10: #{textcnn_forward.1} parent=1 // pred_check
      _
    $region11: #{textcnn_forward.1} parent=1 // pred_check_branch
      %15 = sbr.rel (0) target = $region13
    $region12: #{textcnn_forward.1} parent=1 // pred_region
      _
    $region13: #{textcnn_forward.1} parent=1 // pred_fallthru
      _
    // Predicated region
    $region14: #{textcnn_forward.1} parent=1 // pred_check
      _
    $region15: #{textcnn_forward.1} parent=1 // pred_check_branch
      %17 = sbr.rel (0) target = $region17
    $region16: #{textcnn_forward.1} parent=1 // pred_region
      _
    $region17: #{textcnn_forward.1} parent=1 // pred_fallthru
      _
    %v18 = vld [vmem:[%s0] sm:$0xff]
    %v19 = vld [vmem:[%s0 + $0x8] sm:$0x3]
    %v20 = vld [vmem:[%s0 + $0x10] sm:$0xff]
    %v21 = vld [vmem:[%s0 + $0x18] sm:$0x3]
    %v24 = vrot.slane %v18, 1
    %v25 = vrot.slane %v20, 1
    %26 = vrot.lane.b32.xlu0 %v24, 32
    %v27 = vpop.permute.xlu0 %26
    %28 = vrot.lane.b32.xlu0 %v25, 32
    %v29 = vpop.permute.xlu0 %28
    %v32 = vrot.slane %v18, 2
    %v33 = vrot.slane %v20, 2
    %34 = vrot.lane.b32.xlu0 %v32, 64
    %v35 = vpop.permute.xlu0 %34
    %36 = vrot.lane.b32.xlu0 %v33, 64
    %v37 = vpop.permute.xlu0 %36
    %vm42 = vcmask 1044480
    %v43 = vrot.slane %v18, 3
    %v44 = vrot.slane %v19, 3
    %v45 = vsel %vm42, %v43, %v44
    %v46 = vrot.slane %v20, 3
    %v47 = vrot.slane %v21, 3
    %v48 = vsel %vm42, %v46, %v47
    %49 = vrot.lane.b32.xlu0 %v45, 96
    %v50 = vpop.permute.xlu0 %49
    %51 = vrot.lane.b32.xlu0 %v48, 96
    %v52 = vpop.permute.xlu0 %51
    %vm55 = vcmask 1043456
    %v56 = vrot.slane %v18, 4
    %v57 = vrot.slane %v19, 4
    %v58 = vsel %vm55, %v56, %v57
    %v59 = vrot.slane %v20, 4
    %v60 = vrot.slane %v21, 4
    %v61 = vsel %vm55, %v59, %v60
    %vm62 = vcmask 261120
    %v63 = vsel %vm62, %v18, %v27
    %v64 = vsel %vm62, %v20, %v29
    %vm65 = vcmask 523264
    %v66 = vsel %vm65, %v63, %v35
    %v67 = vsel %vm65, %v64, %v37
    %vm68 = vcmask 785408
    %v69 = vsel %vm68, %v66, %v50
    %v70 = vsel %vm68, %v67, %v52
    %v73 = vcombine.low %v69, %v58
    %v74 = vcombine.high %v69, %v58
    %v76 = vunpack.c.l.s4 1983009808
    %v77 = vunpack.c.0.s8 %v76
    %v78 = vlaneseq
    %v79 = vshrl.u32 %v78, 7
    %v80 = vsub.s32 %v77, %v79
    %v81 = vrot.slane %v73, %v80
    %v83 = vunpack.c.l.s4 1983009808
    %v84 = vunpack.c.0.s8 %v83
    %v85 = vlaneseq
    %v86 = vshrl.u32 %v85, 7
    %v87 = vsub.s32 %v84, %v86
    %v88 = vrot.slane %v74, %v87
    %v89 = vcombine.high %v81, %v81
    %v90 = vcombine.low %v70, %v61
    %v91 = vcombine.high %v70, %v61
    %v93 = vunpack.c.l.s4 1983009808
    %v94 = vunpack.c.0.s8 %v93
    %v95 = vlaneseq
    %v96 = vshrl.u32 %v95, 7
    %v97 = vsub.s32 %v94, %v96
    %v98 = vrot.slane %v90, %v97
    %v100 = vunpack.c.l.s4 1983009808
    %v101 = vunpack.c.0.s8 %v100
    %v102 = vlaneseq
    %v103 = vshrl.u32 %v102, 7
    %v104 = vsub.s32 %v101, %v103
    %v105 = vrot.slane %v91, %v104
    %v106 = vcombine.high %v98, %v98
    %v107 = vld [vmem:[%s1] sm:$0xff]
    %v108 = vld [vmem:[%s1 + $0x8] sm:$0xff]
    %v109 = vld [vmem:[%s1 + $0x10] sm:$0xff]
    %v110 = vld [vmem:[%s1 + $0x18] sm:$0xff]
    %v111 = vld [vmem:[%s1 + $0x20] sm:$0xff]
    %v112 = vld [vmem:[%s1 + $0x28] sm:$0xff]
    %v113 = vld [vmem:[%s1 + $0x30] sm:$0xff]
    %v114 = vld [vmem:[%s1 + $0x38] sm:$0xff]
    %v115 = vld [vmem:[%s1 + $0x40] sm:$0xff]
    %v116 = vld [vmem:[%s1 + $0x48] sm:$0xff]
    %v117 = vld [vmem:[%s1 + $0x50] sm:$0xff]
    %v118 = vld [vmem:[%s1 + $0x58] sm:$0xff]
    %v119 = vld [vmem:[%s1 + $0x60] sm:$0xff]
    %v120 = vld [vmem:[%s1 + $0x68] sm:$0xff]
    %v121 = vld [vmem:[%s1 + $0x70] sm:$0xff]
    %v122 = vld [vmem:[%s1 + $0x78] sm:$0xff]
    %v123 = vld [vmem:[%s1 + $0x80] sm:$0xff]
    %v124 = vld [vmem:[%s1 + $0x88] sm:$0xff]
    %v125 = vld [vmem:[%s1 + $0x90] sm:$0xff]
    %v126 = vld [vmem:[%s1 + $0x98] sm:$0xff]
    %v127 = vcombine.low %v81, %v89
    %v128 = vcombine.low %v88, %v98
    %v130 = vunpack.c.l.s4 1983009808
    %v131 = vunpack.c.0.s8 %v130
    %v132 = vlaneseq
    %v133 = vshrl.u32 %v132, 7
    %v134 = vsub.s32 %v131, %v133
    %v135 = vrot.slane %v127, %v134
    %v137 = vunpack.c.l.s4 1983009808
    %v138 = vunpack.c.0.s8 %v137
    %v139 = vlaneseq
    %v140 = vshrl.u32 %v139, 7
    %v141 = vsub.s32 %v138, %v140
    %v142 = vrot.slane %v128, %v141
    %v143 = vcombine.low %v135, %v142
    %v144 = vcombine.high %v135, %v142
    %v145 = vcombine.low %v106, %v105
    %v147 = vunpack.c.l.s4 1983009808
    %v148 = vunpack.c.0.s8 %v147
    %v149 = vlaneseq
    %v150 = vshrl.u32 %v149, 7
    %v151 = vsub.s32 %v148, %v150
    %v152 = vrot.slane %v145, %v151
    %v153 = vcombine.high %v152, %v152
    %v156 = vsel %vm62, %v144, 0
    %v158 = vsel %vm62, %v153, 0
    %160 = vmatprep.subr.mxu0 0.0
    %161 = vmatpush1.msra.mxu0 %v107
    %162 = vmatprep.subr.mxu0 0.0
    %163 = vmatpush1.msra.mxu0 %v108
    %164 = vmatprep.subr.mxu0 0.0
    %165 = vmatpush1.msra.mxu0 %v109
    %166 = vmatprep.subr.mxu0 0.0
    %167 = vmatpush1.msra.mxu0 %v110
    %168 = vmatprep.subr.mxu0 0.0
    %169 = vmatpush1.msra.mxu0 %v111
    %170 = vmatprep.subr.mxu0 0.0
    %171 = vmatpush1.msra.mxu0 %v112
    %172 = vmatprep.subr.mxu0 0.0
    %173 = vmatpush1.msra.mxu0 %v113
    %174 = vmatprep.subr.mxu0 0.0
    %175 = vmatpush1.msra.mxu0 %v114
    %176 = vmatprep.subr.mxu0 0.0
    %177 = vmatpush1.msra.mxu0 %v115
    %178 = vmatprep.subr.mxu0 0.0
    %179 = vmatpush1.msra.mxu0 %v116
    %180 = vmatprep.subr.mxu0 0.0
    %181 = vmatpush1.msra.mxu0 %v117
    %182 = vmatprep.subr.mxu0 0.0
    %183 = vmatpush1.msra.mxu0 %v118
    %184 = vmatprep.subr.mxu0 0.0
    %185 = vmatpush1.msra.mxu0 %v119
    %186 = vmatprep.subr.mxu0 0.0
    %187 = vmatpush1.msra.mxu0 %v120
    %188 = vmatprep.subr.mxu0 0.0
    %189 = vmatpush1.msra.mxu0 %v121
    %190 = vmatprep.subr.mxu0 0.0
    %191 = vmatpush1.msra.mxu0 %v122
    %192 = vmatprep.subr.mxu0 0.0
    %193 = vmatpush1.msra.mxu0 %v123
    %194 = vmatprep.subr.mxu0 0.0
    %195 = vmatpush1.msra.mxu0 %v124
    %196 = vmatprep.subr.mxu0 0.0
    %197 = vmatpush1.msra.mxu0 %v125
    %198 = vmatprep.subr.mxu0 0.0
    %199 = vmatpush1.msra.mxu0 %v126
    %200 = vmatprep.subr.mxu0 0.0
    %201 = vmatpush1.msra.mxu0 0.0
    %202 = vmatprep.subr.mxu0 0.0
    %203 = vmatpush1.msra.mxu0 0.0
    %204 = vmatprep.subr.mxu0 0.0
    %205 = vmatpush1.msra.mxu0 0.0
    %206 = vmatprep.subr.mxu0 0.0
    %207 = vmatpush1.msra.mxu0 0.0
    %208 = vmatprep.subr.mxu0 0.0
    %209 = vmatpush1.msra.mxu0 0.0
    %210 = vmatprep.subr.mxu0 0.0
    %211 = vmatpush1.msra.mxu0 0.0
    %212 = vmatprep.subr.mxu0 0.0
    %213 = vmatpush1.msra.mxu0 0.0
    %214 = vmatprep.subr.mxu0 0.0
    %215 = vmatpush1.msra.mxu0 0.0
    %216 = vmatprep.subr.mxu0 0.0
    %217 = vmatpush1.msra.mxu0 0.0
    %218 = vmatprep.subr.mxu0 0.0
    %219 = vmatpush1.msra.mxu0 0.0
    %220 = vmatprep.subr.mxu0 0.0
    %221 = vmatpush1.msra.mxu0 0.0
    %222 = vmatprep.subr.mxu0 0.0
    %223 = vmatpush1.msra.mxu0 0.0
    %224 = vmatprep.mubr.f32.mxu0 %v156
    %225 = vmatmul.mubr.f32.gmra.mrb[0].mxu0 %v143
    %v226 = vpop.f32.mrb[0].mxu0
    %v227 = vadd.f32 0.0, %v226
    %v228 = vpop.f32.mrb[0].mxu0
    %229 = vmatprep.mubr.f32.mxu0 %v158
    %230 = vmatmul.mubr.f32.gmra.mrb[0].mxu0 %v152
    %v231 = vpop.f32.mrb[0].mxu0
    %v232 = vadd.f32 0.0, %v231
    %v233 = vpop.f32.mrb[0].mxu0
    %234 = vdwg.mxu0
    %v237 = vcombine.high %v227, %v227
    %v239 = vunpack.c.l.s4 1983009808
    %v240 = vunpack.c.0.s8 %v239
    %v241 = vlaneseq
    %v242 = vshrl.u32 %v241, 7
    %v243 = vsub.s32 %v240, %v242
    %v244 = vrot.slane %v227, %v243
    %v246 = vunpack.c.l.s4 1983009808
    %v247 = vunpack.c.0.s8 %v246
    %v248 = vlaneseq
    %v249 = vshrl.u32 %v248, 7
    %v250 = vsub.s32 %v247, %v249
    %v251 = vrot.slane %v237, %v250
    %v252 = vcombine.high %v244, %v244
    %v253 = vcombine.high %v251, %v251
    %v255 = vunpack.c.l.s4 1983009808
    %v256 = vunpack.c.0.s8 %v255
    %v257 = vlaneseq
    %v258 = vshrl.u32 %v257, 7
    %v259 = vsub.s32 %v256, %v258
    %v260 = vrot.slane %v232, %v259
    %v261 = vcombine.high %v260, %v260
    %v268 = vld [vmem:[%s2] sm:$0x1]
    %v270 = vlaneseq
    %v271 = vshrl.u32 %v270, 7
    %v272 = vsub.s32 0, %v271
    %v273 = vrot.slane %v268, %v272
    %v274 = vcombine.high %v273, %v273
    %v276 = vunpack.c.l.s4 1983009808
    %v277 = vunpack.c.0.s8 %v276
    %v278 = vlaneseq
    %v279 = vshrl.u32 %v278, 7
    %v280 = vsub.s32 %v277, %v279
    %v281 = vrot.slane %v273, %v280
    %v283 = vunpack.c.l.s4 1983009808
    %v284 = vunpack.c.0.s8 %v283
    %v285 = vlaneseq
    %v286 = vshrl.u32 %v285, 7
    %v287 = vsub.s32 %v284, %v286
    %v288 = vrot.slane %v274, %v287
    %v289 = vcombine.high %v281, %v281
    %v293 = vadd.f32 %v244, %v281
    %v294 = vadd.f32 %v252, %v289
    %v295 = vadd.f32 %v251, %v288
    %v296 = vadd.f32 %v253, %v281
    %v297 = vadd.f32 %v260, %v289
    %v298 = vadd.f32 %v261, %v288
    %v299 = vmax.f32 %v293, 0.0
    %v300 = vmax.f32 %v294, 0.0
    %v301 = vmax.f32 %v295, 0.0
    %v302 = vmax.f32 %v296, 0.0
    %v303 = vmax.f32 %v297, 0.0
    %v304 = vmax.f32 %v298, 0.0
    %v305 = vld [vmem:[%s3] sm:$0x3f]
    %v307 = vcombine.high %v305, %v305
    %v309 = vunpack.c.l.s4 1983009808
    %v310 = vunpack.c.0.s8 %v309
    %v311 = vlaneseq
    %v312 = vshrl.u32 %v311, 7
    %v313 = vsub.s32 %v310, %v312
    %v314 = vrot.slane %v305, %v313
    %v316 = vunpack.c.l.s4 1983009808
    %v317 = vunpack.c.0.s8 %v316
    %v318 = vlaneseq
    %v319 = vshrl.u32 %v318, 7
    %v320 = vsub.s32 %v317, %v319
    %v321 = vrot.slane %v307, %v320
    %v322 = vcombine.high %v314, %v314
    %v326 = vadd.f32 %v299, %v314
    %v327 = vadd.f32 %v300, %v322
    %v328 = vadd.f32 %v301, %v321
    %v329 = vadd.f32 %v302, %v314
    %v330 = vadd.f32 %v303, %v322
    %v331 = vadd.f32 %v304, %v321
    %v338 = vcombine.low %v326, %v327
    %v340 = vunpack.c.l.s4 1983009808
    %v341 = vunpack.c.0.s8 %v340
    %v342 = vlaneseq
    %v343 = vshrl.u32 %v342, 7
    %v344 = vsub.s32 %v341, %v343
    %v345 = vrot.slane %v338, %v344
    %v347 = vunpack.c.l.s4 1983009808
    %v348 = vunpack.c.0.s8 %v347
    %v349 = vlaneseq
    %v350 = vshrl.u32 %v349, 7
    %v351 = vsub.s32 %v348, %v350
    %v352 = vrot.slane %v328, %v351
    %v353 = vcombine.low %v345, %v352
    %v354 = vcombine.low %v329, %v330
    %v356 = vunpack.c.l.s4 1983009808
    %v357 = vunpack.c.0.s8 %v356
    %v358 = vlaneseq
    %v359 = vshrl.u32 %v358, 7
    %v360 = vsub.s32 %v357, %v359
    %v361 = vrot.slane %v354, %v360
    %v363 = vunpack.c.l.s4 1983009808
    %v364 = vunpack.c.0.s8 %v363
    %v365 = vlaneseq
    %v366 = vshrl.u32 %v365, 7
    %v367 = vsub.s32 %v364, %v366
    %v368 = vrot.slane %v331, %v367
    %v369 = vcombine.low %v361, %v368
    %vm372 = vcmask 390144
    %v373 = vsel %vm372, %v353, -inf
    %v374 = vrot.slane %v373, 4
    %v375 = vmax.f32 %v373, %v374
    %v376 = vrot.slane %v375, 2
    %v377 = vmax.f32 %v375, %v376
    %v378 = vrot.slane %v377, 1
    %v379 = vmax.f32 %v377, %v378
    %v380 = vsel %vm372, %v369, -inf
    %v381 = vrot.slane %v380, 4
    %v382 = vmax.f32 %v380, %v381
    %v383 = vrot.slane %v382, 2
    %v384 = vmax.f32 %v382, %v383
    %v385 = vrot.slane %v384, 1
    %v386 = vmax.f32 %v384, %v385
    %vm389 = vcmask 1041409
    %v390 = vsel %vm389, %v386, %v379
    %vm392 = vcmask 386048
    %393 = vst.msk [vmem:[#allocation2] sm:$0x3] %vm392, %v390
    // Predicated region
    $region18: #{textcnn_forward.1} parent=1 // pred_check
      _
    $region19: #{textcnn_forward.1} parent=1 // pred_check_branch
      %395 = sbr.rel (0) target = $region21
    $region20: #{textcnn_forward.1} parent=1 // pred_region
      %s397 = ssub.s32 32, 32
      %398 = vsyncadd [#allocation3], %s397
      %s400 = sshll.u32 [#allocation2], 4
      %s401 = int_to_ptr.vmem [resolvable:$true] %s400
      %403 = dma.vmem_to_hbm [thread:$0]  %s401, 32, %s4, [#allocation3]
    $region21: #{textcnn_forward.1} parent=1 // pred_fallthru
      _
    // Predicated region
    $region22: #{textcnn_forward.1} parent=1 // pred_check
      _
    $region23: #{textcnn_forward.1} parent=1 // pred_check_branch
      %405 = sbr.rel (0) target = $region25
    $region24: #{textcnn_forward.1} parent=1 // pred_region
      %406 = dma.done [#allocation3], 32
    $region25: #{textcnn_forward.1} parent=1 // pred_fallthru
      _
    %407 = vsyncpa [#allocation3], 1

</llo_original>
